<compile_context>
chip_gen: v5e
topology: v5e:2x2
jax: 0.10.0
libtpu: 0.0.40
codegen_flags: <defaults>
</compile_context>

<pallas_src>
import jax
import jax.numpy as jnp
from jax.experimental import pallas as pl
from jax.experimental.pallas import tpu as pltpu


def _decoder_proj_kernel(dec_ref, w_dec_ref, b_dec_ref, att2_ref):
    # Computed ONCE for the whole batch (hoisted out of the attention grid).
    att2_ref[...] = (
        jnp.dot(dec_ref[...], w_dec_ref[...], preferred_element_type=jnp.float32)
        + b_dec_ref[...]
    ).astype(att2_ref.dtype)


def _attention_kernel(enc_ref, att2_ref, w_enc_ref, b_enc_ref, w_alpha_ref,
                      a_ref, alpha_ref):
    # enc_ref:     (TB, N, E)   encoder features for TB batch elements
    # att2_ref:    (TB, 1, A)   pre-computed decoder projection (hoisted)
    # w_enc_ref:   (E, A)       b_enc_ref: (1, A)
    # w_alpha_ref: (1, A)       alphas-layer weight stored as a lane row
    # a_ref:       (TB, 1, E)   alpha_ref: (TB, 1, N)   (both lane-dense)
    TB, N, E = enc_ref.shape
    A = w_enc_ref.shape[1]

    enc = enc_ref[...]                     # keep native dtype; MXU accumulates in f32

    # One MXU matmul over all TB*N flattened rows (fills MXU rows instead of
    # issuing N-row matmuls per batch element).
    flat = enc.reshape(TB * N, E)
    att1 = jnp.dot(flat, w_enc_ref[...],
                   preferred_element_type=jnp.float32) + b_enc_ref[...]   # (TB*N, A)
    att1 = att1.reshape(TB, N, A)

    # ReLU(att1 + att2) -- att2 broadcasts over the N (sublane) axis.
    h = jnp.maximum(att1 + att2_ref[...], 0.0)                            # (TB, N, A)

    # Score projection: contract A (the lane dim of h) against the alpha row.
    # b_alpha is intentionally dropped: a constant offset does not change softmax.
    scores = jnp.sum(h * w_alpha_ref[...][None, :, :], axis=-1)           # (TB, N), N in lanes

    # Softmax over N (lane axis) -> alpha is produced lane-dense, no transpose.
    m = jnp.max(scores, axis=-1, keepdims=True)
    p = jnp.exp(scores - m)
    s = jnp.sum(p, axis=-1, keepdims=True)
    alpha = p / s                                                         # (TB, N)
    # NOTE: pl.reciprocal(s, approx=True) would move the divide to the EUP but
    # perturbs alpha beyond the 1e-5 test tolerance, so exact division is kept.

    alpha3 = alpha[:, None, :]                                            # (TB, 1, N)

    # Weighted sum on the MXU: (TB,1,N) x (TB,N,E) -> (TB,1,E).
    a = jnp.einsum('bqn,bne->bqe', alpha3.astype(enc.dtype), enc,
                   preferred_element_type=jnp.float32)

    a_ref[...] = a.astype(a_ref.dtype)
    alpha_ref[...] = alpha3.astype(alpha_ref.dtype)


def attention_pallas(encoder_out, decoder_hidden, params, *, batch_tile=None):
    """encoder_out: [B, N, E], decoder_hidden: [B, D] -> (a [B, E], alpha [B, N])."""
    B, N, E = encoder_out.shape
    D = decoder_hidden.shape[1]
    A = params["w_enc"].shape[1]

    # --- Prologue: decoder projection for the whole batch, one tiny kernel. ---
    att2 = pl.pallas_call(
        _decoder_proj_kernel,
        out_shape=jax.ShapeDtypeStruct((B, A), jnp.float32),
    )(decoder_hidden, params["w_dec"], params["b_dec"])
    att2 = att2.reshape(B, 1, A)

    # --- Batch-tile choice: pack batch elements per grid step so each step has
    # a reasonable number of flattened rows (amortizes per-step overhead and
    # fills MXU rows), while dividing B exactly. ---
    if batch_tile is None:
        target = max(1, 256 // max(N, 1))
        batch_tile = 1
        for cand in range(min(B, target), 0, -1):
            if B % cand == 0:
                batch_tile = cand
                break
    TB = batch_tile
    num_tiles = B // TB

    w_alpha_row = params["w_alpha"].reshape(1, A)   # (A,1) -> (1,A), done once in XLA

    a3, alpha3 = pl.pallas_call(
        _attention_kernel,
        out_shape=(jax.ShapeDtypeStruct((B, 1, E), jnp.float32),
                   jax.ShapeDtypeStruct((B, 1, N), jnp.float32)),
        grid_spec=pltpu.PrefetchScalarGridSpec(
            num_scalar_prefetch=0,
            grid=(num_tiles,),
            in_specs=[
                pl.BlockSpec((TB, N, E), lambda t: (t, 0, 0)),   # encoder_out tile
                pl.BlockSpec((TB, 1, A), lambda t: (t, 0, 0)),   # hoisted att2 tile
                pl.BlockSpec((E, A), lambda t: (0, 0)),          # w_enc (resident)
                pl.BlockSpec((1, A), lambda t: (0, 0)),          # b_enc (resident)
                pl.BlockSpec((1, A), lambda t: (0, 0)),          # w_alpha row (resident)
            ],
            out_specs=[
                pl.BlockSpec((TB, 1, E), lambda t: (t, 0, 0)),
                pl.BlockSpec((TB, 1, N), lambda t: (t, 0, 0)),
            ],
        ),
        compiler_params=pltpu.CompilerParams(
            dimension_semantics=("parallel",),
            # Explicit budget: tiles here are tiny; 32 MiB is comfortably within
            # every generation's scoped VMEM (incl. v7x's 64 MiB physical).
            vmem_limit_bytes=32 * 1024 * 1024,
        ),
    )(encoder_out, att2, params["w_enc"], params["b_enc"], w_alpha_row)

    return a3.reshape(B, E), alpha3.reshape(B, N)


def attention_reference(encoder_out, decoder_hidden, params):
    att1 = encoder_out @ params["w_enc"] + params["b_enc"][0]
    att2 = decoder_hidden @ params["w_dec"] + params["b_dec"][0]
    h = jnp.maximum(att1 + att2[:, None, :], 0.0)
    att = (h @ params["w_alpha"])[..., 0] + params["b_alpha"][0, 0]
    alpha = jax.nn.softmax(att, axis=1)
    a = (encoder_out * alpha[:, :, None]).sum(axis=1)
    return a, alpha


if __name__ == "__main__":
    # Small shapes consistent with the module.
    B, N = 2, 8                 # batch, number of encoder positions (num_pixels)
    E, D, A = 32, 16, 32        # encoder_dim, decoder_dim, attention_dim

    key = jax.random.PRNGKey(0)
    k_enc, k_dec, kwe, kbe, kwd, kbd, kwa, kba = jax.random.split(key, 8)

    encoder_out = jax.random.normal(k_enc, (B, N, E), jnp.float32)
    decoder_hidden = jax.random.normal(k_dec, (B, D), jnp.float32)

    # Parameters stored already transposed to [in, out].
    params = {
        "w_enc": 0.1 * jax.random.normal(kwe, (E, A), jnp.float32),
        "b_enc": 0.1 * jax.random.normal(kbe, (1, A), jnp.float32),
        "w_dec": 0.1 * jax.random.normal(kwd, (D, A), jnp.float32),
        "b_dec": 0.1 * jax.random.normal(kbd, (1, A), jnp.float32),
        "w_alpha": 0.1 * jax.random.normal(kwa, (A, 1), jnp.float32),
        "b_alpha": 0.1 * jax.random.normal(kba, (1, 1), jnp.float32),
    }

    a, alpha = attention_pallas(encoder_out, decoder_hidden, params)
    jax.block_until_ready((a, alpha))

    a_ref, alpha_ref = attention_reference(encoder_out, decoder_hidden, params)
    assert jnp.allclose(a, a_ref, atol=1e-5, rtol=1e-5), "a mismatch"
    assert jnp.allclose(alpha, alpha_ref, atol=1e-5, rtol=1e-5), "alpha mismatch"

    print("KERNEL_OK")
</pallas_src>

<mosaic_0001>
module attributes {stable_mosaic.version = 11 : i64} {
  func.func @_decoder_proj_kernel(%arg0: memref<2x16xf32, #tpu.memory_space<vmem>>, %arg1: memref<16x32xf32, #tpu.memory_space<vmem>>, %arg2: memref<1x32xf32, #tpu.memory_space<vmem>>, %arg3: memref<2x32xf32, #tpu.memory_space<vmem>>) attributes {dimension_semantics = [], scalar_prefetch = 0 : i64, scratch_operands = 0 : i64, tpu.core_type = #tpu.core_type<tc>} {
    %c0 = arith.constant 0 : index
    %c0_0 = arith.constant 0 : index
    %0 = vector.load %arg0[%c0, %c0_0] : memref<2x16xf32, #tpu.memory_space<vmem>>, vector<2x16xf32>
    %c0_1 = arith.constant 0 : index
    %c0_2 = arith.constant 0 : index
    %1 = vector.load %arg1[%c0_1, %c0_2] : memref<16x32xf32, #tpu.memory_space<vmem>>, vector<16x32xf32>
    %cst = arith.constant dense<0.000000e+00> : vector<2x32xf32>
    %2 = tpu.matmul %0, %1, %cst {dimension_numbers = #tpu.dot_dimension_numbers<[1], [0], [0], [1], [0, 0, 1, 1], [], []>} : vector<2x16xf32>, vector<16x32xf32>, vector<2x32xf32> -> vector<2x32xf32>
    %c0_3 = arith.constant 0 : index
    %c0_4 = arith.constant 0 : index
    %3 = vector.load %arg2[%c0_3, %c0_4] : memref<1x32xf32, #tpu.memory_space<vmem>>, vector<1x32xf32>
    %4 = vector.broadcast %3 : vector<1x32xf32> to vector<2x32xf32>
    %5 = arith.addf %2, %4 : vector<2x32xf32>
    %c0_5 = arith.constant 0 : index
    %c0_6 = arith.constant 0 : index
    %6 = vector.load %arg3[%c0_5, %c0_6] : memref<2x32xf32, #tpu.memory_space<vmem>>, vector<2x32xf32>
    tpu.vector_store %arg3[%c0_5, %c0_6], %5 {strides = array<i32>} : memref<2x32xf32, #tpu.memory_space<vmem>>, vector<2x32xf32>,
    return
  }
}

</mosaic_0001>

<llo_original>
// kernel: tpu_custom_call.1
$region0: #{tpu_custom_call.1}
  #allocation0 [shape = 'u32[]', space=smem, size = 0x4, offset = 0x4, fixed_abs, tag = 'smem constant byte address 0x4 - core index']
  #allocation1 [shape = 'u32[72,128]{1,0:T(1,128)}', space=vmem, size = 0x9000, scoped, tag = 'internal scratch']
  %s0 = inlined_call_operand.hbm [shape: f32[2,16], index: 0, kind: input, shape index: {}]
  %s1 = inlined_call_operand.hbm [shape: f32[16,32], index: 1, kind: input, shape index: {}]
  %s2 = inlined_call_operand.vmem [shape: f32[1,32], index: 2, kind: input, shape index: {}]
  %s3 = inlined_call_operand.hbm [shape: f32[2,32], index: 3, kind: output, shape index: {}]
  %s4 = sld [smem:[#allocation0]]
  $region30: #{tpu_custom_call.1} parent=0
    _
  %s6 = ssub.s32 1, %s4
  %s7 = scalar_select 0, %s6, %s4
  $region1: #{tpu_custom_call.1} parent=0
    #allocation2 [shape = 'u8[1024]{0}', space=vmem, size = 0x400, scoped, tag = 'input window, operand 0, single buffered']
    #allocation3 [shape = 's32[1]{0}', space=sflag, size = 0x4, scoped, tag = 'scoped memory for tpu_custom_call.1']
    #allocation4 [shape = 's32[1]{0}', space=sflag, size = 0x4, scoped, tag = 'scoped memory for tpu_custom_call.1']
    #allocation5 [shape = 'u8[8192]{0}', space=vmem, size = 0x2000, scoped, tag = 'input window, operand 1, single buffered']
    #allocation6 [shape = 's32[1]{0}', space=sflag, size = 0x4, scoped, tag = 'scoped memory for tpu_custom_call.1']
    #allocation7 [shape = 'u8[1024]{0}', space=vmem, size = 0x400, scoped, tag = 'output window, operand 0, single buffered']
    %8 = vsyncpa [#allocation3], 0
    %9 = vsyncpa [#allocation6], 0
    %10 = vsyncpa [#allocation4], 0
    // Predicated region
    $region2: #{tpu_custom_call.1} parent=1 // pred_check
      _
    $region3: #{tpu_custom_call.1} parent=1 // pred_check_branch
      %12 = sbr.rel (0) target = $region5
    $region4: #{tpu_custom_call.1} parent=1 // pred_region
      %14 = vsyncadd [#allocation3], 0
      %s16 = sshll.u32 %s0, 4
      %s17 = int_to_ptr.hbm [resolvable:$true] %s16
      %s18 = sshll.u32 [#allocation2], 4
      %s19 = int_to_ptr.vmem [resolvable:$true] %s18
      %21 = dma.hbm_to_vmem [thread:$0]  %s17, 32, %s19, [#allocation3]
    $region5: #{tpu_custom_call.1} parent=1 // pred_fallthru
      _
    // Predicated region
    $region6: #{tpu_custom_call.1} parent=1 // pred_check
      _
    $region7: #{tpu_custom_call.1} parent=1 // pred_check_branch
      %23 = sbr.rel (0) target = $region9
    $region8: #{tpu_custom_call.1} parent=1 // pred_region
      %25 = vsyncadd [#allocation6], 0
      %s26 = sshll.u32 %s1, 4
      %s27 = int_to_ptr.hbm [resolvable:$true] %s26
      %s28 = sshll.u32 [#allocation5], 4
      %s29 = int_to_ptr.vmem [resolvable:$true] %s28
      %34 = dma.hbm_to_vmem [thread:$0]  %s27, 256, %s29, [#allocation6], 128, 128, 8
    $region9: #{tpu_custom_call.1} parent=1 // pred_fallthru
      _
    // Predicated region
    $region10: #{tpu_custom_call.1} parent=1 // pred_check
      _
    $region11: #{tpu_custom_call.1} parent=1 // pred_check_branch
      %36 = sbr.rel (0) target = $region13
    $region12: #{tpu_custom_call.1} parent=1 // pred_region
      _
    $region13: #{tpu_custom_call.1} parent=1 // pred_fallthru
      _
    // Predicated region
    $region14: #{tpu_custom_call.1} parent=1 // pred_check
      _
    $region15: #{tpu_custom_call.1} parent=1 // pred_check_branch
      %38 = sbr.rel (0) target = $region17
    $region16: #{tpu_custom_call.1} parent=1 // pred_region
      %40 = dma.done [#allocation3], 32
    $region17: #{tpu_custom_call.1} parent=1 // pred_fallthru
      _
    // Predicated region
    $region18: #{tpu_custom_call.1} parent=1 // pred_check
      _
    $region19: #{tpu_custom_call.1} parent=1 // pred_check_branch
      %42 = sbr.rel (0) target = $region21
    $region20: #{tpu_custom_call.1} parent=1 // pred_region
      %44 = dma.done [#allocation6], 256
    $region21: #{tpu_custom_call.1} parent=1 // pred_fallthru
      _
    %v45 = vld [vmem:[#allocation2] sm:$0x3]
    %v46 = vld [vmem:[#allocation5] sm:$0xff]
    %v47 = vld [vmem:[#allocation5 + $0x8] sm:$0xff]
    %v48 = vld [vmem:[%s2] sm:$0x1]
    %v50 = vperm.slane %v48, 0
    %vm52 = vcmask 130048
    %v54 = vsel %vm52, %v45, 0
    %56 = vmatpush.msra.mxu0 0.0
    %57 = vmatpush.msra.mxu0 0.0
    %58 = vmatpush.msra.mxu0 0.0
    %59 = vmatpush.msra.mxu0 0.0
    %60 = vmatpush.msra.mxu0 0.0
    %61 = vmatpush.msra.mxu0 0.0
    %62 = vmatpush.msra.mxu0 0.0
    %63 = vmatpush.msra.mxu0 0.0
    %64 = vmatpush.msra.mxu0 0.0
    %65 = vmatpush.msra.mxu0 0.0
    %66 = vmatpush.msra.mxu0 0.0
    %67 = vmatpush.msra.mxu0 0.0
    %68 = vmatpush.msra.mxu0 0.0
    %69 = vmatpush.msra.mxu0 0.0
    %70 = vmatpush.msra.mxu0 %v47
    %71 = vmatpush.msra.mxu0 %v46
    %72 = vmatmul.f32.gmra.mxu0 %v54
    %v73 = vpop.f32.mrf.mxu0
    %v74 = vadd.f32 %v50, %v73
    %75 = vdwg.mxu0
    %vm76 = vcmask 254976
    %77 = vst.msk [vmem:[#allocation7] sm:$0x3] %vm76, %v74
    // Predicated region
    $region22: #{tpu_custom_call.1} parent=1 // pred_check
      _
    $region23: #{tpu_custom_call.1} parent=1 // pred_check_branch
      %79 = sbr.rel (0) target = $region25
    $region24: #{tpu_custom_call.1} parent=1 // pred_region
      %81 = vsyncadd [#allocation4], 0
      %s83 = sshll.u32 [#allocation7], 4
      %s84 = int_to_ptr.vmem [resolvable:$true] %s83
      %s85 = sshll.u32 %s3, 4
      %s86 = int_to_ptr.hbm [resolvable:$true] %s85
      %88 = dma.vmem_to_hbm [thread:$0]  %s84, 32, %s86, [#allocation4]
    $region25: #{tpu_custom_call.1} parent=1 // pred_fallthru
      _
    // Predicated region
    $region26: #{tpu_custom_call.1} parent=1 // pred_check
      _
    $region27: #{tpu_custom_call.1} parent=1 // pred_check_branch
      %90 = sbr.rel (0) target = $region29
    $region28: #{tpu_custom_call.1} parent=1 // pred_region
      %92 = dma.done [#allocation4], 32
    $region29: #{tpu_custom_call.1} parent=1 // pred_fallthru
      _
    %93 = vsyncpa [#allocation3], 1
    %94 = vsyncpa [#allocation6], 1
    %95 = vsyncpa [#allocation4], 1

</llo_original>
